<compile_context>
chip_gen: v5e
topology: v5e:2x2
jax: 0.10.0
libtpu: 0.0.40
codegen_flags: <defaults>
</compile_context>

<pallas_src>
import jax
import jax.numpy as jnp
from jax.experimental import pallas as pl
from jax.experimental.pallas import tpu as pltpu

HIDDEN_NEURONS = 8
INPUT_DIM = 17
NUM_ACTIONS = 4


def _round_up(n, m):
    return ((n + m - 1) // m) * m


def _qnn_kernel(x_ref, w1_ref, b1_ref, w2_ref, b2_ref, w3_ref, b3_ref, o_ref):
    # x tile arrives batch-major [Bt, INPUT_DIM] straight from HBM (single
    # contiguous DMA).  Flip to feature-major so intermediates are lane-dense.
    x_fm = x_ref[...].T                                   # [INPUT_DIM, Bt]

    # layer 1: ReLU(W1 @ x + b1)   -> [HIDDEN, Bt]
    h1 = jnp.dot(w1_ref[...], x_fm, preferred_element_type=jnp.float32)
    h1 = jnp.maximum(h1 + b1_ref[...], 0.0)               # bias [HIDDEN, 1] bcasts over lanes

    # layer 2: ReLU(W2 @ h1 + b2)  -> [8, Bt]
    h2 = jnp.dot(w2_ref[...], h1, preferred_element_type=jnp.float32)
    h2 = jnp.maximum(h2 + b2_ref[...], 0.0)

    # layer 3 (no activation):      -> [NUM_ACTIONS, Bt]
    out = jnp.dot(w3_ref[...], h2, preferred_element_type=jnp.float32)
    out = out + b3_ref[...]

    # Store batch-major so the caller gets PyTorch-native [B, NUM_ACTIONS]
    # with no wrapper-side transpose pass.
    o_ref[...] = out.T.astype(o_ref.dtype)


def _choose_tiling(batch, max_block):
    """Pick (block_b, padded_batch, n_steps).

    * >= 2 grid steps whenever the batch allows it (lets v7x split the batch
      across both TensorCores; harmless elsewhere).
    * block_b capped (default 4096) so the lane-padded VMEM tiles stay small.
    * padding bounded to a couple of 128-lane slivers, not a full huge tile.
    """
    b128 = _round_up(batch, 128)
    n_steps = max(2, pl.cdiv(b128, max_block))
    n_steps = min(n_steps, b128 // 128)          # cannot tile below 128 lanes
    n_steps = max(n_steps, 1)
    block_b = _round_up(pl.cdiv(b128, n_steps), 128)
    n_steps = pl.cdiv(b128, block_b)
    return block_b, block_b * n_steps, n_steps


def qnn_forward(x, params, *, max_block_b=4096):
    """Forward pass of qnn.

    x:      [B, INPUT_DIM] float32 (batch-major, PyTorch convention).
    params: PyTorch-native shapes:
              w1 [HIDDEN, INPUT_DIM], b1 [HIDDEN, 1],
              w2 [8, HIDDEN],         b2 [8, 1],
              w3 [NUM_ACTIONS, 8],    b3 [NUM_ACTIONS, 1]
    returns [B, NUM_ACTIONS] float32 (batch-major).
    """
    B = x.shape[0]
    w1, b1 = params["w1"], params["b1"]
    w2, b2 = params["w2"], params["b2"]
    w3, b3 = params["w3"], params["b3"]

    block_b, b_pad, n_steps = _choose_tiling(B, max_block_b)
    if b_pad != B:
        # Only hit when B is not 128-aligned; padded rows are sliced off below.
        x = jnp.pad(x, ((0, b_pad - B), (0, 0)))

    # Constant index_map -> weights/biases stay resident in VMEM across steps.
    resident = lambda arr: pl.BlockSpec(arr.shape, lambda i: (0, 0))

    out = pl.pallas_call(
        _qnn_kernel,
        out_shape=jax.ShapeDtypeStruct((b_pad, NUM_ACTIONS), jnp.float32),
        grid=(n_steps,),
        in_specs=[
            # Contiguous batch-major x tile straight from HBM.
            pl.BlockSpec((block_b, INPUT_DIM), lambda i: (i, 0)),
            resident(w1), resident(b1),
            resident(w2), resident(b2),
            resident(w3), resident(b3),
        ],
        out_specs=pl.BlockSpec((block_b, NUM_ACTIONS), lambda i: (i, 0)),
        compiler_params=pltpu.CompilerParams(
            dimension_semantics=("parallel",),
            vmem_limit_bytes=32 * 1024 * 1024,   # keep v5e double-buffered too
        ),
    )(x, w1, b1, w2, b2, w3, b3)

    return out if b_pad == B else out[:B]


def init_params(key):
    """torch.nn.Linear-style init (uniform +/- 1/sqrt(fan_in)).

    Weights in PyTorch-native [out, in] form; biases as [out, 1] columns
    (broadcast over the lane/batch axis inside the kernel)."""
    ks = jax.random.split(key, 6)

    def linear(kw, kb, fan_in, fan_out):
        bound = 1.0 / float(fan_in) ** 0.5
        w = jax.random.uniform(kw, (fan_out, fan_in), jnp.float32, -bound, bound)
        b = jax.random.uniform(kb, (fan_out, 1), jnp.float32, -bound, bound)
        return w, b

    w1, b1 = linear(ks[0], ks[1], INPUT_DIM, HIDDEN_NEURONS)
    w2, b2 = linear(ks[2], ks[3], HIDDEN_NEURONS, 8)
    w3, b3 = linear(ks[4], ks[5], 8, NUM_ACTIONS)
    return {"w1": w1, "b1": b1, "w2": w2, "b2": b2, "w3": w3, "b3": b3}


def _reference_forward(x, p):
    """Pure-JAX f32 reference with PyTorch y = x @ W.T + b semantics."""
    h1 = jnp.maximum(x @ p["w1"].T + p["b1"].T, 0.0)
    h2 = jnp.maximum(h1 @ p["w2"].T + p["b2"].T, 0.0)
    return h2 @ p["w3"].T + p["b3"].T


if __name__ == "__main__":
    key = jax.random.PRNGKey(0)
    k_x, k_p = jax.random.split(key)

    B = 512  # small demo batch -> 2 pipelined grid steps of 256 lanes each
    x = jax.random.normal(k_x, (B, INPUT_DIM), jnp.float32)
    params = init_params(k_p)

    out = qnn_forward(x, params)
    out = jax.block_until_ready(out)

    ref = _reference_forward(x, params)

    assert out.shape == (B, NUM_ACTIONS)
    max_err = float(jnp.max(jnp.abs(out - ref)))
    assert jnp.allclose(out, ref, atol=5e-3, rtol=5e-3), max_err

    print("KERNEL_OK")
</pallas_src>

<mosaic_0001>
module attributes {stable_mosaic.version = 11 : i64} {
  func.func @_qnn_kernel(%arg0: i32, %arg1: memref<256x17xf32, #tpu.memory_space<vmem>>, %arg2: memref<8x17xf32, #tpu.memory_space<vmem>>, %arg3: memref<8x1xf32, #tpu.memory_space<vmem>>, %arg4: memref<8x8xf32, #tpu.memory_space<vmem>>, %arg5: memref<8x1xf32, #tpu.memory_space<vmem>>, %arg6: memref<4x8xf32, #tpu.memory_space<vmem>>, %arg7: memref<4x1xf32, #tpu.memory_space<vmem>>, %arg8: memref<256x4xf32, #tpu.memory_space<vmem>>) attributes {dimension_semantics = [#tpu.dimension_semantics<parallel>], iteration_bounds = array<i64: 2>, scalar_prefetch = 0 : i64, scratch_operands = 0 : i64, tpu.core_type = #tpu.core_type<tc>, window_params = [{transform_indices = @transform_0, window_bounds = array<i64: 256, 17>}, {pipeline_mode = #tpu.pipeline_mode<synchronous>, transform_indices = @transform_1, window_bounds = array<i64: 8, 17>}, {pipeline_mode = #tpu.pipeline_mode<synchronous>, transform_indices = @transform_2, window_bounds = array<i64: 8, 1>}, {pipeline_mode = #tpu.pipeline_mode<synchronous>, transform_indices = @transform_3, window_bounds = array<i64: 8, 8>}, {pipeline_mode = #tpu.pipeline_mode<synchronous>, transform_indices = @transform_4, window_bounds = array<i64: 8, 1>}, {pipeline_mode = #tpu.pipeline_mode<synchronous>, transform_indices = @transform_5, window_bounds = array<i64: 4, 8>}, {pipeline_mode = #tpu.pipeline_mode<synchronous>, transform_indices = @transform_6, window_bounds = array<i64: 4, 1>}, {transform_indices = @transform_7, window_bounds = array<i64: 256, 4>}]} {
    %c0 = arith.constant 0 : index
    %c0_0 = arith.constant 0 : index
    %0 = vector.load %arg1[%c0, %c0_0] : memref<256x17xf32, #tpu.memory_space<vmem>>, vector<256x17xf32>
    %1 = tpu.transpose %0, [1, 0] : vector<256x17xf32> -> vector<17x256xf32>
    %c0_1 = arith.constant 0 : index
    %c0_2 = arith.constant 0 : index
    %2 = vector.load %arg2[%c0_1, %c0_2] : memref<8x17xf32, #tpu.memory_space<vmem>>, vector<8x17xf32>
    %cst = arith.constant dense<0.000000e+00> : vector<8x256xf32>
    %3 = tpu.matmul %2, %1, %cst {dimension_numbers = #tpu.dot_dimension_numbers<[1], [0], [0], [1], [0, 0, 1, 1], [], []>} : vector<8x17xf32>, vector<17x256xf32>, vector<8x256xf32> -> vector<8x256xf32>
    %c0_3 = arith.constant 0 : index
    %c0_4 = arith.constant 0 : index
    %4 = vector.load %arg3[%c0_3, %c0_4] : memref<8x1xf32, #tpu.memory_space<vmem>>, vector<8x1xf32>
    %5 = vector.broadcast %4 : vector<8x1xf32> to vector<8x256xf32>
    %6 = arith.addf %3, %5 : vector<8x256xf32>
    %cst_5 = arith.constant 0.000000e+00 : f32
    %7 = vector.broadcast %cst_5 : f32 to vector<8x256xf32>
    %8 = arith.maximumf %6, %7 : vector<8x256xf32>
    %c0_6 = arith.constant 0 : index
    %c0_7 = arith.constant 0 : index
    %9 = vector.load %arg4[%c0_6, %c0_7] : memref<8x8xf32, #tpu.memory_space<vmem>>, vector<8x8xf32>
    %cst_8 = arith.constant dense<0.000000e+00> : vector<8x256xf32>
    %10 = tpu.matmul %9, %8, %cst_8 {dimension_numbers = #tpu.dot_dimension_numbers<[1], [0], [0], [1], [0, 0, 1, 1], [], []>} : vector<8x8xf32>, vector<8x256xf32>, vector<8x256xf32> -> vector<8x256xf32>
    %c0_9 = arith.constant 0 : index
    %c0_10 = arith.constant 0 : index
    %11 = vector.load %arg5[%c0_9, %c0_10] : memref<8x1xf32, #tpu.memory_space<vmem>>, vector<8x1xf32>
    %12 = vector.broadcast %11 : vector<8x1xf32> to vector<8x256xf32>
    %13 = arith.addf %10, %12 : vector<8x256xf32>
    %cst_11 = arith.constant 0.000000e+00 : f32
    %14 = vector.broadcast %cst_11 : f32 to vector<8x256xf32>
    %15 = arith.maximumf %13, %14 : vector<8x256xf32>
    %c0_12 = arith.constant 0 : index
    %c0_13 = arith.constant 0 : index
    %16 = vector.load %arg6[%c0_12, %c0_13] : memref<4x8xf32, #tpu.memory_space<vmem>>, vector<4x8xf32>
    %cst_14 = arith.constant dense<0.000000e+00> : vector<4x256xf32>
    %17 = tpu.matmul %16, %15, %cst_14 {dimension_numbers = #tpu.dot_dimension_numbers<[1], [0], [0], [1], [0, 0, 1, 1], [], []>} : vector<4x8xf32>, vector<8x256xf32>, vector<4x256xf32> -> vector<4x256xf32>
    %c0_15 = arith.constant 0 : index
    %c0_16 = arith.constant 0 : index
    %18 = vector.load %arg7[%c0_15, %c0_16] : memref<4x1xf32, #tpu.memory_space<vmem>>, vector<4x1xf32>
    %19 = vector.broadcast %18 : vector<4x1xf32> to vector<4x256xf32>
    %20 = arith.addf %17, %19 : vector<4x256xf32>
    %21 = tpu.transpose %20, [1, 0] : vector<4x256xf32> -> vector<256x4xf32>
    %c0_17 = arith.constant 0 : index
    %c0_18 = arith.constant 0 : index
    %22 = vector.load %arg8[%c0_17, %c0_18] : memref<256x4xf32, #tpu.memory_space<vmem>>, vector<256x4xf32>
    tpu.vector_store %arg8[%c0_17, %c0_18], %21 {strides = array<i32>} : memref<256x4xf32, #tpu.memory_space<vmem>>, vector<256x4xf32>,
    return
  }
  func.func @transform_0(%arg0: i32) -> (i32, i32) {
    %c0_i32 = arith.constant 0 : i32
    %c0_i32_0 = arith.constant 0 : i32
    return %arg0, %c0_i32 : i32, i32
  }
  func.func @transform_1(%arg0: i32) -> (i32, i32) {
    %c0_i32 = arith.constant 0 : i32
    %c0_i32_0 = arith.constant 0 : i32
    %c0_i32_1 = arith.constant 0 : i32
    return %c0_i32, %c0_i32_0 : i32, i32
  }
  func.func @transform_2(%arg0: i32) -> (i32, i32) {
    %c0_i32 = arith.constant 0 : i32
    %c0_i32_0 = arith.constant 0 : i32
    %c0_i32_1 = arith.constant 0 : i32
    return %c0_i32, %c0_i32_0 : i32, i32
  }
  func.func @transform_3(%arg0: i32) -> (i32, i32) {
    %c0_i32 = arith.constant 0 : i32
    %c0_i32_0 = arith.constant 0 : i32
    %c0_i32_1 = arith.constant 0 : i32
    return %c0_i32, %c0_i32_0 : i32, i32
  }
  func.func @transform_4(%arg0: i32) -> (i32, i32) {
    %c0_i32 = arith.constant 0 : i32
    %c0_i32_0 = arith.constant 0 : i32
    %c0_i32_1 = arith.constant 0 : i32
    return %c0_i32, %c0_i32_0 : i32, i32
  }
  func.func @transform_5(%arg0: i32) -> (i32, i32) {
    %c0_i32 = arith.constant 0 : i32
    %c0_i32_0 = arith.constant 0 : i32
    %c0_i32_1 = arith.constant 0 : i32
    return %c0_i32, %c0_i32_0 : i32, i32
  }
  func.func @transform_6(%arg0: i32) -> (i32, i32) {
    %c0_i32 = arith.constant 0 : i32
    %c0_i32_0 = arith.constant 0 : i32
    %c0_i32_1 = arith.constant 0 : i32
    return %c0_i32, %c0_i32_0 : i32, i32
  }
  func.func @transform_7(%arg0: i32) -> (i32, i32) {
    %c0_i32 = arith.constant 0 : i32
    %c0_i32_0 = arith.constant 0 : i32
    return %arg0, %c0_i32 : i32, i32
  }
}

</mosaic_0001>

<llo_original>
// kernel: tpu_custom_call.1
$region0: #{tpu_custom_call.1}
  #allocation0 [shape = 'u32[]', space=smem, size = 0x4, offset = 0x4, fixed_abs, tag = 'smem constant byte address 0x4 - core index']
  #allocation1 [shape = 'u32[72,128]{1,0:T(1,128)}', space=vmem, size = 0x9000, scoped, tag = 'internal scratch']
  %s0 = inlined_call_operand.vmem [shape: f32[512,17], index: 0, kind: input, shape index: {}]
  %s1 = inlined_call_operand.vmem [shape: f32[8,17], index: 1, kind: input, shape index: {}]
  %s2 = inlined_call_operand.vmem [shape: f32[8,1], index: 2, kind: input, shape index: {}]
  %s3 = inlined_call_operand.vmem [shape: f32[8,8], index: 3, kind: input, shape index: {}]
  %s4 = inlined_call_operand.vmem [shape: f32[8,1], index: 4, kind: input, shape index: {}]
  %s5 = inlined_call_operand.vmem [shape: f32[4,8], index: 5, kind: input, shape index: {}]
  %s6 = inlined_call_operand.vmem [shape: f32[4,1], index: 6, kind: input, shape index: {}]
  %s7 = inlined_call_operand.vmem [shape: f32[512,4], index: 7, kind: output, shape index: {}]
  %s8 = sld [smem:[#allocation0]]
  $region61: #{tpu_custom_call.1} parent=0
    _
  %s10 = ssub.s32 1, %s8
  %s11 = scalar_select 0, %s10, %s8
  loop: start=0, step=1, limit=4
  $region2: #{tpu_custom_call.1} parent=0 // loop_pre_header
    _
  $region3: #{tpu_custom_call.1} parent=0 // loop_header
    %s13 = sphi 0, %s17
    %p14 = scmp.ge.s32.totalorder %s13, 4
    %s23 = sphi 0, %s25
    %s26 = sphi 0, %s23
    %s27 = sphi 0, %s26
    %s43 = sphi 0, %s27
    %s47 = sphi 0, %s47
    %s49 = sphi 0, %s47
    %s50 = sphi 0, %s49
    %s64 = sphi 0, %s50
    %s68 = sphi 0, %s68
    %s70 = sphi 0, %s68
    %s71 = sphi 0, %s70
    %s85 = sphi 0, %s71
    %s89 = sphi 0, %s89
    %s91 = sphi 0, %s89
    %s92 = sphi 0, %s91
    %s106 = sphi 0, %s92
    %s110 = sphi 0, %s110
    %s112 = sphi 0, %s110
    %s113 = sphi 0, %s112
    %s127 = sphi 0, %s113
    %s131 = sphi 0, %s131
    %s133 = sphi 0, %s131
    %s134 = sphi 0, %s133
    %s148 = sphi 0, %s134
    %s152 = sphi 0, %s152
    %s154 = sphi 0, %s152
    %s155 = sphi 0, %s154
    %s169 = sphi 0, %s155
    %s175 = sphi 0, %s177
    %s178 = sphi 0, %s175
    %s179 = sphi 0, %s178
    %s195 = sphi 0, %s179
  $region4: #{tpu_custom_call.1} parent=0 // loop_header_branch
    %16 = sbr.rel (%p14) target = $region8
  $region5: #{tpu_custom_call.1} parent=0 // loop_body
    %s18 = ssub.s32 %s13, 1
    %s19 = ssub.s32 %s13, 2
    %s20 = sadd.s32 %s13, 1
    %s21 = ssub.s32 %s13, %s20
    %p22 = scmp.eq.s32.totalorder %s21, 0
    %s24 = sadd.s32 %s23, 1
    %s25 = scalar_select %p22, %s23, %s24
    %p28 = pneg %p22
    %p29 = scmp.eq.s32.totalorder %s13, 1
    %p30 = por %p28, %p29
    %p31 = scmp.ne.s32.totalorder %s23, %s26
    %p32 = scmp.eq.s32.totalorder %s13, 0
    %p33 = por %p31, %p32
    %p34 = scmp.ne.s32.totalorder %s23, %s26
    %p35 = scmp.eq.s32.totalorder %s18, 1
    %p36 = por %p34, %p35
    %p37 = scmp.ne.s32.totalorder %s26, %s27
    %p38 = scmp.eq.s32.totalorder %s18, 0
    %p39 = por %p37, %p38
    %p40 = scmp.ne.s32.totalorder %s26, %s27
    %p41 = scmp.eq.s32.totalorder %s19, 1
    %p42 = por %p40, %p41
    %p44 = scmp.ne.s32.totalorder %s27, %s43
    %p45 = scmp.eq.s32.totalorder %s19, 0
    %p46 = por %p44, %p45
    %s48 = sadd.s32 %s47, 1
    %p51 = scmp.eq.s32.totalorder %s13, 1
    %p52 = scmp.ne.s32.totalorder %s47, %s49
    %p53 = scmp.eq.s32.totalorder %s13, 0
    %p54 = por %p52, %p53
    %p55 = scmp.ne.s32.totalorder %s47, %s49
    %p56 = scmp.eq.s32.totalorder %s18, 1
    %p57 = por %p55, %p56
    %p58 = scmp.ne.s32.totalorder %s49, %s50
    %p59 = scmp.eq.s32.totalorder %s18, 0
    %p60 = por %p58, %p59
    %p61 = scmp.ne.s32.totalorder %s49, %s50
    %p62 = scmp.eq.s32.totalorder %s19, 1
    %p63 = por %p61, %p62
    %p65 = scmp.ne.s32.totalorder %s50, %s64
    %p66 = scmp.eq.s32.totalorder %s19, 0
    %p67 = por %p65, %p66
    %s69 = sadd.s32 %s68, 1
    %p72 = scmp.eq.s32.totalorder %s13, 1
    %p73 = scmp.ne.s32.totalorder %s68, %s70
    %p74 = scmp.eq.s32.totalorder %s13, 0
    %p75 = por %p73, %p74
    %p76 = scmp.ne.s32.totalorder %s68, %s70
    %p77 = scmp.eq.s32.totalorder %s18, 1
    %p78 = por %p76, %p77
    %p79 = scmp.ne.s32.totalorder %s70, %s71
    %p80 = scmp.eq.s32.totalorder %s18, 0
    %p81 = por %p79, %p80
    %p82 = scmp.ne.s32.totalorder %s70, %s71
    %p83 = scmp.eq.s32.totalorder %s19, 1
    %p84 = por %p82, %p83
    %p86 = scmp.ne.s32.totalorder %s71, %s85
    %p87 = scmp.eq.s32.totalorder %s19, 0
    %p88 = por %p86, %p87
    %s90 = sadd.s32 %s89, 1
    %p93 = scmp.eq.s32.totalorder %s13, 1
    %p94 = scmp.ne.s32.totalorder %s89, %s91
    %p95 = scmp.eq.s32.totalorder %s13, 0
    %p96 = por %p94, %p95
    %p97 = scmp.ne.s32.totalorder %s89, %s91
    %p98 = scmp.eq.s32.totalorder %s18, 1
    %p99 = por %p97, %p98
    %p100 = scmp.ne.s32.totalorder %s91, %s92
    %p101 = scmp.eq.s32.totalorder %s18, 0
    %p102 = por %p100, %p101
    %p103 = scmp.ne.s32.totalorder %s91, %s92
    %p104 = scmp.eq.s32.totalorder %s19, 1
    %p105 = por %p103, %p104
    %p107 = scmp.ne.s32.totalorder %s92, %s106
    %p108 = scmp.eq.s32.totalorder %s19, 0
    %p109 = por %p107, %p108
    %s111 = sadd.s32 %s110, 1
    %p114 = scmp.eq.s32.totalorder %s13, 1
    %p115 = scmp.ne.s32.totalorder %s110, %s112
    %p116 = scmp.eq.s32.totalorder %s13, 0
    %p117 = por %p115, %p116
    %p118 = scmp.ne.s32.totalorder %s110, %s112
    %p119 = scmp.eq.s32.totalorder %s18, 1
    %p120 = por %p118, %p119
    %p121 = scmp.ne.s32.totalorder %s112, %s113
    %p122 = scmp.eq.s32.totalorder %s18, 0
    %p123 = por %p121, %p122
    %p124 = scmp.ne.s32.totalorder %s112, %s113
    %p125 = scmp.eq.s32.totalorder %s19, 1
    %p126 = por %p124, %p125
    %p128 = scmp.ne.s32.totalorder %s113, %s127
    %p129 = scmp.eq.s32.totalorder %s19, 0
    %p130 = por %p128, %p129
    %s132 = sadd.s32 %s131, 1
    %p135 = scmp.eq.s32.totalorder %s13, 1
    %p136 = scmp.ne.s32.totalorder %s131, %s133
    %p137 = scmp.eq.s32.totalorder %s13, 0
    %p138 = por %p136, %p137
    %p139 = scmp.ne.s32.totalorder %s131, %s133
    %p140 = scmp.eq.s32.totalorder %s18, 1
    %p141 = por %p139, %p140
    %p142 = scmp.ne.s32.totalorder %s133, %s134
    %p143 = scmp.eq.s32.totalorder %s18, 0
    %p144 = por %p142, %p143
    %p145 = scmp.ne.s32.totalorder %s133, %s134
    %p146 = scmp.eq.s32.totalorder %s19, 1
    %p147 = por %p145, %p146
    %p149 = scmp.ne.s32.totalorder %s134, %s148
    %p150 = scmp.eq.s32.totalorder %s19, 0
    %p151 = por %p149, %p150
    %s153 = sadd.s32 %s152, 1
    %p156 = scmp.eq.s32.totalorder %s13, 1
    %p157 = scmp.ne.s32.totalorder %s152, %s154
    %p158 = scmp.eq.s32.totalorder %s13, 0
    %p159 = por %p157, %p158
    %p160 = scmp.ne.s32.totalorder %s152, %s154
    %p161 = scmp.eq.s32.totalorder %s18, 1
    %p162 = por %p160, %p161
    %p163 = scmp.ne.s32.totalorder %s154, %s155
    %p164 = scmp.eq.s32.totalorder %s18, 0
    %p165 = por %p163, %p164
    %p166 = scmp.ne.s32.totalorder %s154, %s155
    %p167 = scmp.eq.s32.totalorder %s19, 1
    %p168 = por %p166, %p167
    %p170 = scmp.ne.s32.totalorder %s155, %s169
    %p171 = scmp.eq.s32.totalorder %s19, 0
    %p172 = por %p170, %p171
    %s173 = ssub.s32 %s13, %s20
    %p174 = scmp.eq.s32.totalorder %s173, 0
    %s176 = sadd.s32 %s175, 1
    %s177 = scalar_select %p174, %s175, %s176
    %p180 = pneg %p174
    %p181 = scmp.eq.s32.totalorder %s13, 1
    %p182 = por %p180, %p181
    %p183 = scmp.ne.s32.totalorder %s175, %s178
    %p184 = scmp.eq.s32.totalorder %s13, 0
    %p185 = por %p183, %p184
    %p186 = scmp.ne.s32.totalorder %s175, %s178
    %p187 = scmp.eq.s32.totalorder %s18, 1
    %p188 = por %p186, %p187
    %p189 = scmp.ne.s32.totalorder %s178, %s179
    %p190 = scmp.eq.s32.totalorder %s18, 0
    %p191 = por %p189, %p190
    %p192 = scmp.ne.s32.totalorder %s178, %s179
    %p193 = scmp.eq.s32.totalorder %s19, 1
    %p194 = por %p192, %p193
    %p196 = scmp.ne.s32.totalorder %s179, %s195
    %p197 = scmp.eq.s32.totalorder %s19, 0
    %p198 = por %p196, %p197
    %p199 = scmp.le.s32.totalorder 1, %s13
    %p200 = scmp.lt.s32.totalorder %s13, 3
    %p201 = pnand %p199, %p200
    %p202 = pneg %p201
    // Predicated region
    $region9: #{tpu_custom_call.1} parent=5 // pred_check
      _
    $region10: #{tpu_custom_call.1} parent=5 // pred_check_branch
      %204 = sbr.rel (%p201) target = $region12
    $region11: #{tpu_custom_call.1} parent=5 // pred_region
      %s205 = ssub.s32 %s13, 1
      // Predicated region
      $region13: #{tpu_custom_call.1} parent=11 // pred_check
        %p206 = pneg %p60
      $region14: #{tpu_custom_call.1} parent=11 // pred_check_branch
        %208 = sbr.rel (%p206) target = $region16
      $region15: #{tpu_custom_call.1} parent=11 // pred_region
        _
      $region16: #{tpu_custom_call.1} parent=11 // pred_fallthru
        _
      // Predicated region
      $region17: #{tpu_custom_call.1} parent=11 // pred_check
        %p209 = pneg %p81
      $region18: #{tpu_custom_call.1} parent=11 // pred_check_branch
        %211 = sbr.rel (%p209) target = $region20
      $region19: #{tpu_custom_call.1} parent=11 // pred_region
        _
      $region20: #{tpu_custom_call.1} parent=11 // pred_fallthru
        _
      // Predicated region
      $region21: #{tpu_custom_call.1} parent=11 // pred_check
        %p212 = pneg %p102
      $region22: #{tpu_custom_call.1} parent=11 // pred_check_branch
        %214 = sbr.rel (%p212) target = $region24
      $region23: #{tpu_custom_call.1} parent=11 // pred_region
        _
      $region24: #{tpu_custom_call.1} parent=11 // pred_fallthru
        _
      // Predicated region
      $region25: #{tpu_custom_call.1} parent=11 // pred_check
        %p215 = pneg %p123
      $region26: #{tpu_custom_call.1} parent=11 // pred_check_branch
        %217 = sbr.rel (%p215) target = $region28
      $region27: #{tpu_custom_call.1} parent=11 // pred_region
        _
      $region28: #{tpu_custom_call.1} parent=11 // pred_fallthru
        _
      // Predicated region
      $region29: #{tpu_custom_call.1} parent=11 // pred_check
        %p218 = pneg %p144
      $region30: #{tpu_custom_call.1} parent=11 // pred_check_branch
        %220 = sbr.rel (%p218) target = $region32
      $region31: #{tpu_custom_call.1} parent=11 // pred_region
        _
      $region32: #{tpu_custom_call.1} parent=11 // pred_fallthru
        _
      // Predicated region
      $region33: #{tpu_custom_call.1} parent=11 // pred_check
        %p221 = pneg %p165
      $region34: #{tpu_custom_call.1} parent=11 // pred_check_branch
        %223 = sbr.rel (%p221) target = $region36
      $region35: #{tpu_custom_call.1} parent=11 // pred_region
        _
      $region36: #{tpu_custom_call.1} parent=11 // pred_fallthru
        _
    $region12: #{tpu_custom_call.1} parent=5 // pred_fallthru
      _
    %p224 = scmp.lt.s32.totalorder %s13, 2
    // Predicated region
    $region37: #{tpu_custom_call.1} parent=5 // pred_check
      %p225 = pneg %p224
    $region38: #{tpu_custom_call.1} parent=5 // pred_check_branch
      %227 = sbr.rel (%p225) target = $region40
    $region39: #{tpu_custom_call.1} parent=5 // pred_region
      // Predicated region
      $region41: #{tpu_custom_call.1} parent=39 // pred_check
        %p228 = pneg %p33
      $region42: #{tpu_custom_call.1} parent=39 // pred_check_branch
        %230 = sbr.rel (%p228) target = $region44
      $region43: #{tpu_custom_call.1} parent=39 // pred_region
        %s231 = smul.u32 32, %s13
        %p232 = scmp.lt.s32.totalorder %s231, 63
        %s233 = scalar_select %p232, %s231, 63
        %s234 = smul.addr %s233, 8
        %s235 = scalar_lea.vmem %s0, %s234
        %s236 = smul.u32 32, %s13
      $region44: #{tpu_custom_call.1} parent=39 // pred_fallthru
        _
    $region40: #{tpu_custom_call.1} parent=5 // pred_fallthru
      _
    %p237 = scmp.le.s32.totalorder 1, %s13
    %p238 = scmp.lt.s32.totalorder %s13, 3
    %p239 = pnand %p237, %p238
    %p240 = pneg %p239
    // Predicated region
    $region45: #{tpu_custom_call.1} parent=5 // pred_check
      _
    $region46: #{tpu_custom_call.1} parent=5 // pred_check_branch
      %242 = sbr.rel (%p239) target = $region48
    $region47: #{tpu_custom_call.1} parent=5 // pred_region
      %s243 = ssub.s32 %s13, 1
      %s244 = smul.u32 32, %s18
      %p245 = scmp.lt.s32.totalorder %s244, 63
      %s246 = scalar_select %p245, %s244, 63
      %s247 = smul.addr %s246, 8
      %s248 = scalar_lea.vmem %s0, %s247
      %p249 = pneg %p39
      %p250 = pneg %p36
      %p251 = pneg %p60
      %p252 = pneg %p57
      %p253 = pneg %p81
      %p254 = pneg %p78
      %p255 = pneg %p102
      %p256 = pneg %p99
      %p257 = pneg %p123
      %p258 = pneg %p120
      %p259 = pneg %p144
      %p260 = pneg %p141
      %p261 = pneg %p165
      %p262 = pneg %p162
      %p263 = pneg %p191
      %p264 = pneg %p188
      %s265 = smul.u32 32, %s18
      %p266 = scmp.lt.s32.totalorder %s265, 63
      %s267 = scalar_select %p266, %s265, 63
      %s268 = smul.addr %s267, 8
      %s269 = scalar_lea.vmem %s7, %s268
      %s270 = smul.u32 32, %s18
      %p271 = scmp.lt.s32.totalorder %s270, 63
      %s272 = scalar_select %p271, %s270, 63
      %s273 = smul.addr %s272, 8
      %s274 = scalar_lea.vmem %s0, %s273
      %s275 = smul.u32 32, %s18
      %s276 = smul.u32 32, %s18
      %p277 = scmp.lt.s32.totalorder %s276, 63
      %s278 = scalar_select %p277, %s276, 63
      %s279 = smul.addr %s278, 8
      %s280 = scalar_lea.vmem %s7, %s279
      %s281 = smul.u32 32, %s18
      %v282 = vld [vmem:[%s274] sm:$0xff]
      %v283 = vld [vmem:[%s274 + $0x8] sm:$0xff]
      %v284 = vld [vmem:[%s274 + $0x10] sm:$0xff]
      %v285 = vld [vmem:[%s274 + $0x18] sm:$0xff]
      %v286 = vld [vmem:[%s274 + $0x20] sm:$0xff]
      %v287 = vld [vmem:[%s274 + $0x28] sm:$0xff]
      %v288 = vld [vmem:[%s274 + $0x30] sm:$0xff]
      %v289 = vld [vmem:[%s274 + $0x38] sm:$0xff]
      %v290 = vld [vmem:[%s274 + $0x40] sm:$0xff]
      %v291 = vld [vmem:[%s274 + $0x48] sm:$0xff]
      %v292 = vld [vmem:[%s274 + $0x50] sm:$0xff]
      %v293 = vld [vmem:[%s274 + $0x58] sm:$0xff]
      %v294 = vld [vmem:[%s274 + $0x60] sm:$0xff]
      %v295 = vld [vmem:[%s274 + $0x68] sm:$0xff]
      %v296 = vld [vmem:[%s274 + $0x70] sm:$0xff]
      %v297 = vld [vmem:[%s274 + $0x78] sm:$0xff]
      %v298 = vld [vmem:[%s274 + $0x80] sm:$0xff]
      %v299 = vld [vmem:[%s274 + $0x88] sm:$0xff]
      %v300 = vld [vmem:[%s274 + $0x90] sm:$0xff]
      %v301 = vld [vmem:[%s274 + $0x98] sm:$0xff]
      %v302 = vld [vmem:[%s274 + $0xa0] sm:$0xff]
      %v303 = vld [vmem:[%s274 + $0xa8] sm:$0xff]
      %v304 = vld [vmem:[%s274 + $0xb0] sm:$0xff]
      %v305 = vld [vmem:[%s274 + $0xb8] sm:$0xff]
      %v306 = vld [vmem:[%s274 + $0xc0] sm:$0xff]
      %v307 = vld [vmem:[%s274 + $0xc8] sm:$0xff]
      %v308 = vld [vmem:[%s274 + $0xd0] sm:$0xff]
      %v309 = vld [vmem:[%s274 + $0xd8] sm:$0xff]
      %v310 = vld [vmem:[%s274 + $0xe0] sm:$0xff]
      %v311 = vld [vmem:[%s274 + $0xe8] sm:$0xff]
      %v312 = vld [vmem:[%s274 + $0xf0] sm:$0xff]
      %v313 = vld [vmem:[%s274 + $0xf8] sm:$0xff]
      %v314 = vld [vmem:[%s1] sm:$0xff]
      %v315 = vld [vmem:[%s2] sm:$0xff]
      %317 = vset.pattern.permute.xlu0 0
      %318 = vperm.xlu0 %317, %v315
      %v319 = vpop.permute.xlu0 %318
      %vm321 = vcmask 138240
      %v323 = vsel %vm321, %v314, 0
      %v326 = vsel %vm321, %v282, 0
      %v329 = vsel %vm321, %v283, 0
      %v332 = vsel %vm321, %v284, 0
      %v335 = vsel %vm321, %v285, 0
      %v338 = vsel %vm321, %v286, 0
      %v341 = vsel %vm321, %v287, 0
      %v344 = vsel %vm321, %v288, 0
      %v347 = vsel %vm321, %v289, 0
      %v350 = vsel %vm321, %v290, 0
      %v353 = vsel %vm321, %v291, 0
      %v356 = vsel %vm321, %v292, 0
      %v359 = vsel %vm321, %v293, 0
      %v362 = vsel %vm321, %v294, 0
      %v365 = vsel %vm321, %v295, 0
      %v368 = vsel %vm321, %v296, 0
      %v371 = vsel %vm321, %v297, 0
      %v374 = vsel %vm321, %v298, 0
      %v377 = vsel %vm321, %v299, 0
      %v380 = vsel %vm321, %v300, 0
      %v383 = vsel %vm321, %v301, 0
      %v386 = vsel %vm321, %v302, 0
      %v389 = vsel %vm321, %v303, 0
      %v392 = vsel %vm321, %v304, 0
      %v395 = vsel %vm321, %v305, 0
      %v398 = vsel %vm321, %v306, 0
      %v401 = vsel %vm321, %v307, 0
      %v404 = vsel %vm321, %v308, 0
      %v407 = vsel %vm321, %v309, 0
      %v410 = vsel %vm321, %v310, 0
      %v413 = vsel %vm321, %v311, 0
      %v416 = vsel %vm321, %v312, 0
      %v419 = vsel %vm321, %v313, 0
      %421 = vmatpush.xpose.msra.mxu0 %v371
      %422 = vmatpush.xpose.msra.mxu0 %v368
      %423 = vmatpush.xpose.msra.mxu0 %v365
      %424 = vmatpush.xpose.msra.mxu0 %v362
      %425 = vmatpush.xpose.msra.mxu0 %v359
      %426 = vmatpush.xpose.msra.mxu0 %v356
      %427 = vmatpush.xpose.msra.mxu0 %v353
      %428 = vmatpush.xpose.msra.mxu0 %v350
      %429 = vmatpush.xpose.msra.mxu0 %v347
      %430 = vmatpush.xpose.msra.mxu0 %v344
      %431 = vmatpush.xpose.msra.mxu0 %v341
      %432 = vmatpush.xpose.msra.mxu0 %v338
      %433 = vmatpush.xpose.msra.mxu0 %v335
      %434 = vmatpush.xpose.msra.mxu0 %v332
      %435 = vmatpush.xpose.msra.mxu0 %v329
      %436 = vmatpush.xpose.msra.mxu0 %v326
      %437 = vmatmul.f32.gmra.mxu0 %v323
      %v438 = vpop.f32.mrf.mxu0
      %v439 = vadd.f32 %v319, %v438
      %440 = vdwg.mxu0
      %441 = vmatpush.xpose.msra.mxu0 %v419
      %442 = vmatpush.xpose.msra.mxu0 %v416
      %443 = vmatpush.xpose.msra.mxu0 %v413
      %444 = vmatpush.xpose.msra.mxu0 %v410
      %445 = vmatpush.xpose.msra.mxu0 %v407
      %446 = vmatpush.xpose.msra.mxu0 %v404
      %447 = vmatpush.xpose.msra.mxu0 %v401
      %448 = vmatpush.xpose.msra.mxu0 %v398
      %449 = vmatpush.xpose.msra.mxu0 %v395
      %450 = vmatpush.xpose.msra.mxu0 %v392
      %451 = vmatpush.xpose.msra.mxu0 %v389
      %452 = vmatpush.xpose.msra.mxu0 %v386
      %453 = vmatpush.xpose.msra.mxu0 %v383
      %454 = vmatpush.xpose.msra.mxu0 %v380
      %455 = vmatpush.xpose.msra.mxu0 %v377
      %456 = vmatpush.xpose.msra.mxu0 %v374
      %457 = vmatmul.f32.gmra.mxu0 %v323
      %v458 = vpop.f32.mrf.mxu0
      %v459 = vadd.f32 %v319, %v458
      %460 = vdwg.mxu0
      %v461 = vmax.f32 %v439, 0.0
      %v462 = vmax.f32 %v459, 0.0
      %v463 = vld [vmem:[%s3] sm:$0xff]
      %v464 = vld [vmem:[%s4] sm:$0xff]
      %466 = vset.pattern.permute.xlu0 0
      %467 = vperm.xlu0 %466, %v464
      %v468 = vpop.permute.xlu0 %467
      %vm470 = vcmask 64512
      %v472 = vsel %vm470, %v463, 0
      %474 = vmatpush.msra.mxu0 0.0
      %475 = vmatpush.msra.mxu0 0.0
      %476 = vmatpush.msra.mxu0 0.0
      %477 = vmatpush.msra.mxu0 0.0
      %478 = vmatpush.msra.mxu0 0.0
      %479 = vmatpush.msra.mxu0 0.0
      %480 = vmatpush.msra.mxu0 0.0
      %481 = vmatpush.msra.mxu0 0.0
      %482 = vmatpush.msra.mxu0 0.0
      %483 = vmatpush.msra.mxu0 0.0
      %484 = vmatpush.msra.mxu0 0.0
      %485 = vmatpush.msra.mxu0 0.0
      %486 = vmatpush.msra.mxu0 0.0
      %487 = vmatpush.msra.mxu0 0.0
      %488 = vmatpush.msra.mxu0 0.0
      %489 = vmatpush.msra.mxu0 %v461
      %490 = vmatmul.f32.gmra.mxu0 %v472
      %v491 = vpop.f32.mrf.mxu0
      %v492 = vadd.f32 %v468, %v491
      %493 = vdwg.mxu0
      %494 = vmatpush.msra.mxu0 0.0
      %495 = vmatpush.msra.mxu0 0.0
      %496 = vmatpush.msra.mxu0 0.0
      %497 = vmatpush.msra.mxu0 0.0
      %498 = vmatpush.msra.mxu0 0.0
      %499 = vmatpush.msra.mxu0 0.0
      %500 = vmatpush.msra.mxu0 0.0
      %501 = vmatpush.msra.mxu0 0.0
      %502 = vmatpush.msra.mxu0 0.0
      %503 = vmatpush.msra.mxu0 0.0
      %504 = vmatpush.msra.mxu0 0.0
      %505 = vmatpush.msra.mxu0 0.0
      %506 = vmatpush.msra.mxu0 0.0
      %507 = vmatpush.msra.mxu0 0.0
      %508 = vmatpush.msra.mxu0 0.0
      %509 = vmatpush.msra.mxu0 %v462
      %510 = vmatmul.f32.gmra.mxu0 %v472
      %v511 = vpop.f32.mrf.mxu0
      %v512 = vadd.f32 %v468, %v511
      %513 = vdwg.mxu0
      %v514 = vmax.f32 %v492, 0.0
      %v515 = vmax.f32 %v512, 0.0
      %v516 = vld [vmem:[%s5] sm:$0xf]
      %v517 = vld [vmem:[%s6] sm:$0xf]
      %519 = vset.pattern.permute.xlu0 0
      %520 = vperm.xlu0 %519, %v517
      %v521 = vpop.permute.xlu0 %520
      %v524 = vsel %vm470, %v516, 0
      %526 = vmatpush.msra.mxu0 0.0
      %527 = vmatpush.msra.mxu0 0.0
      %528 = vmatpush.msra.mxu0 0.0
      %529 = vmatpush.msra.mxu0 0.0
      %530 = vmatpush.msra.mxu0 0.0
      %531 = vmatpush.msra.mxu0 0.0
      %532 = vmatpush.msra.mxu0 0.0
      %533 = vmatpush.msra.mxu0 0.0
      %534 = vmatpush.msra.mxu0 0.0
      %535 = vmatpush.msra.mxu0 0.0
      %536 = vmatpush.msra.mxu0 0.0
      %537 = vmatpush.msra.mxu0 0.0
      %538 = vmatpush.msra.mxu0 0.0
      %539 = vmatpush.msra.mxu0 0.0
      %540 = vmatpush.msra.mxu0 0.0
      %541 = vmatpush.msra.mxu0 %v514
      %542 = vmatmul.f32.gmra.mxu0 %v524
      %v543 = vpop.f32.mrf.mxu0
      %v544 = vadd.f32 %v521, %v543
      %545 = vdwg.mxu0
      %546 = vmatpush.msra.mxu0 0.0
      %547 = vmatpush.msra.mxu0 0.0
      %548 = vmatpush.msra.mxu0 0.0
      %549 = vmatpush.msra.mxu0 0.0
      %550 = vmatpush.msra.mxu0 0.0
      %551 = vmatpush.msra.mxu0 0.0
      %552 = vmatpush.msra.mxu0 0.0
      %553 = vmatpush.msra.mxu0 0.0
      %554 = vmatpush.msra.mxu0 0.0
      %555 = vmatpush.msra.mxu0 0.0
      %556 = vmatpush.msra.mxu0 0.0
      %557 = vmatpush.msra.mxu0 0.0
      %558 = vmatpush.msra.mxu0 0.0
      %559 = vmatpush.msra.mxu0 0.0
      %560 = vmatpush.msra.mxu0 0.0
      %561 = vmatpush.msra.mxu0 %v515
      %562 = vmatmul.f32.gmra.mxu0 %v524
      %v563 = vpop.f32.mrf.mxu0
      %v564 = vadd.f32 %v521, %v563
      %565 = vdwg.mxu0
      %566 = vxpose.xlu0.b32.start [1/16] %v544, 128
      %567 = vxpose.xlu0.b32.cont [2/16] 0.0, 128
      %568 = vxpose.xlu0.b32.cont [3/16] 0.0, 128
      %569 = vxpose.xlu0.b32.cont [4/16] 0.0, 128
      %570 = vxpose.xlu0.b32.cont [5/16] 0.0, 128
      %571 = vxpose.xlu0.b32.cont [6/16] 0.0, 128
      %572 = vxpose.xlu0.b32.cont [7/16] 0.0, 128
      %573 = vxpose.xlu0.b32.cont [8/16] 0.0, 128
      %574 = vxpose.xlu0.b32.cont [9/16] 0.0, 128
      %575 = vxpose.xlu0.b32.cont [10/16] 0.0, 128
      %576 = vxpose.xlu0.b32.cont [11/16] 0.0, 128
      %577 = vxpose.xlu0.b32.cont [12/16] 0.0, 128
      %578 = vxpose.xlu0.b32.cont [13/16] 0.0, 128
      %579 = vxpose.xlu0.b32.cont [14/16] 0.0, 128
      %580 = vxpose.xlu0.b32.cont [15/16] 0.0, 128
      %581 = vxpose.xlu0.b32.end [16/16] 0.0, 128
      %v582 = vpop.trf.xlu0
      %v583 = vpop.trf.xlu0
      %v584 = vpop.trf.xlu0
      %v585 = vpop.trf.xlu0
      %v586 = vpop.trf.xlu0
      %v587 = vpop.trf.xlu0
      %v588 = vpop.trf.xlu0
      %v589 = vpop.trf.xlu0
      %v590 = vpop.trf.xlu0
      %v591 = vpop.trf.xlu0
      %v592 = vpop.trf.xlu0
      %v593 = vpop.trf.xlu0
      %v594 = vpop.trf.xlu0
      %v595 = vpop.trf.xlu0
      %v596 = vpop.trf.xlu0
      %v597 = vpop.trf.xlu0
      %598 = vxpose.xlu0.b32.start [1/16] %v564, 128
      %599 = vxpose.xlu0.b32.cont [2/16] 0.0, 128
      %600 = vxpose.xlu0.b32.cont [3/16] 0.0, 128
      %601 = vxpose.xlu0.b32.cont [4/16] 0.0, 128
      %602 = vxpose.xlu0.b32.cont [5/16] 0.0, 128
      %603 = vxpose.xlu0.b32.cont [6/16] 0.0, 128
      %604 = vxpose.xlu0.b32.cont [7/16] 0.0, 128
      %605 = vxpose.xlu0.b32.cont [8/16] 0.0, 128
      %606 = vxpose.xlu0.b32.cont [9/16] 0.0, 128
      %607 = vxpose.xlu0.b32.cont [10/16] 0.0, 128
      %608 = vxpose.xlu0.b32.cont [11/16] 0.0, 128
      %609 = vxpose.xlu0.b32.cont [12/16] 0.0, 128
      %610 = vxpose.xlu0.b32.cont [13/16] 0.0, 128
      %611 = vxpose.xlu0.b32.cont [14/16] 0.0, 128
      %612 = vxpose.xlu0.b32.cont [15/16] 0.0, 128
      %613 = vxpose.xlu0.b32.end [16/16] 0.0, 128
      %v614 = vpop.trf.xlu0
      %v615 = vpop.trf.xlu0
      %v616 = vpop.trf.xlu0
      %v617 = vpop.trf.xlu0
      %v618 = vpop.trf.xlu0
      %v619 = vpop.trf.xlu0
      %v620 = vpop.trf.xlu0
      %v621 = vpop.trf.xlu0
      %v622 = vpop.trf.xlu0
      %v623 = vpop.trf.xlu0
      %v624 = vpop.trf.xlu0
      %v625 = vpop.trf.xlu0
      %v626 = vpop.trf.xlu0
      %v627 = vpop.trf.xlu0
      %v628 = vpop.trf.xlu0
      %v629 = vpop.trf.xlu0
      %vm630 = vcmask 31744
      %631 = vst.msk [vmem:[%s280] sm:$0xff] %vm630, %v582
      %632 = vst.msk [vmem:[%s280 + $0x8] sm:$0xff] %vm630, %v583
      %633 = vst.msk [vmem:[%s280 + $0x10] sm:$0xff] %vm630, %v584
      %634 = vst.msk [vmem:[%s280 + $0x18] sm:$0xff] %vm630, %v585
      %635 = vst.msk [vmem:[%s280 + $0x20] sm:$0xff] %vm630, %v586
      %636 = vst.msk [vmem:[%s280 + $0x28] sm:$0xff] %vm630, %v587
      %637 = vst.msk [vmem:[%s280 + $0x30] sm:$0xff] %vm630, %v588
      %638 = vst.msk [vmem:[%s280 + $0x38] sm:$0xff] %vm630, %v589
      %639 = vst.msk [vmem:[%s280 + $0x40] sm:$0xff] %vm630, %v590
      %640 = vst.msk [vmem:[%s280 + $0x48] sm:$0xff] %vm630, %v591
      %641 = vst.msk [vmem:[%s280 + $0x50] sm:$0xff] %vm630, %v592
      %642 = vst.msk [vmem:[%s280 + $0x58] sm:$0xff] %vm630, %v593
      %643 = vst.msk [vmem:[%s280 + $0x60] sm:$0xff] %vm630, %v594
      %644 = vst.msk [vmem:[%s280 + $0x68] sm:$0xff] %vm630, %v595
      %645 = vst.msk [vmem:[%s280 + $0x70] sm:$0xff] %vm630, %v596
      %646 = vst.msk [vmem:[%s280 + $0x78] sm:$0xff] %vm630, %v597
      %647 = vst.msk [vmem:[%s280 + $0x80] sm:$0xff] %vm630, %v614
      %648 = vst.msk [vmem:[%s280 + $0x88] sm:$0xff] %vm630, %v615
      %649 = vst.msk [vmem:[%s280 + $0x90] sm:$0xff] %vm630, %v616
      %650 = vst.msk [vmem:[%s280 + $0x98] sm:$0xff] %vm630, %v617
      %651 = vst.msk [vmem:[%s280 + $0xa0] sm:$0xff] %vm630, %v618
      %652 = vst.msk [vmem:[%s280 + $0xa8] sm:$0xff] %vm630, %v619
      %653 = vst.msk [vmem:[%s280 + $0xb0] sm:$0xff] %vm630, %v620
      %654 = vst.msk [vmem:[%s280 + $0xb8] sm:$0xff] %vm630, %v621
      %655 = vst.msk [vmem:[%s280 + $0xc0] sm:$0xff] %vm630, %v622
      %656 = vst.msk [vmem:[%s280 + $0xc8] sm:$0xff] %vm630, %v623
      %657 = vst.msk [vmem:[%s280 + $0xd0] sm:$0xff] %vm630, %v624
      %658 = vst.msk [vmem:[%s280 + $0xd8] sm:$0xff] %vm630, %v625
      %659 = vst.msk [vmem:[%s280 + $0xe0] sm:$0xff] %vm630, %v626
      %660 = vst.msk [vmem:[%s280 + $0xe8] sm:$0xff] %vm630, %v627
      %661 = vst.msk [vmem:[%s280 + $0xf0] sm:$0xff] %vm630, %v628
      %662 = vst.msk [vmem:[%s280 + $0xf8] sm:$0xff] %vm630, %v629
      %s663 = smul.u32 32, %s18
      %p664 = scmp.lt.s32.totalorder %s663, 63
      %s665 = scalar_select %p664, %s663, 63
      %s666 = smul.addr %s665, 8
      %s667 = scalar_lea.vmem %s7, %s666
      // Predicated region
      $region49: #{tpu_custom_call.1} parent=47 // pred_check
        %p668 = pneg %p188
      $region50: #{tpu_custom_call.1} parent=47 // pred_check_branch
        %670 = sbr.rel (%p668) target = $region52
      $region51: #{tpu_custom_call.1} parent=47 // pred_region
        %s671 = smul.u32 32, %s18
      $region52: #{tpu_custom_call.1} parent=47 // pred_fallthru
        _
    $region48: #{tpu_custom_call.1} parent=5 // pred_fallthru
      _
    %p672 = scmp.le.s32.totalorder 2, %s13
    // Predicated region
    $region53: #{tpu_custom_call.1} parent=5 // pred_check
      %p673 = pneg %p672
    $region54: #{tpu_custom_call.1} parent=5 // pred_check_branch
      %675 = sbr.rel (%p673) target = $region56
    $region55: #{tpu_custom_call.1} parent=5 // pred_region
      %s676 = ssub.s32 %s13, 2
      // Predicated region
      $region57: #{tpu_custom_call.1} parent=55 // pred_check
        %p677 = pneg %p194
      $region58: #{tpu_custom_call.1} parent=55 // pred_check_branch
        %679 = sbr.rel (%p677) target = $region60
      $region59: #{tpu_custom_call.1} parent=55 // pred_region
        %s680 = smul.u32 32, %s19
        %p681 = scmp.lt.s32.totalorder %s680, 63
        %s682 = scalar_select %p681, %s680, 63
        %s683 = smul.addr %s682, 8
        %s684 = scalar_lea.vmem %s7, %s683
      $region60: #{tpu_custom_call.1} parent=55 // pred_fallthru
        _
    $region56: #{tpu_custom_call.1} parent=5 // pred_fallthru
      _
  $region6: #{tpu_custom_call.1} parent=0 // loop_footer
    %s17 = sadd.s32 1, %s13
  $region7: #{tpu_custom_call.1} parent=0 // loop_footer_branch
    %12 = sbr.rel target = $region3
  $region8: #{tpu_custom_call.1} parent=0 // loop_exit
    _

</llo_original>
